<compile_context>
chip_gen: v6e
topology: v6e:2x2x1
jax: 0.10.0
libtpu: 0.0.40
codegen_flags: <defaults>
</compile_context>

<pallas_src>
import functools

import jax
import jax.numpy as jnp
from jax import lax
from jax.experimental import pallas as pl
from jax.experimental.pallas import tpu as pltpu


def _round_up(n, m):
    return ((n + m - 1) // m) * m


def _pick_tm_blocks(n_blocks, max_blocks):
    """Pick blocks-per-tile: a divisor of n_blocks (no extra padding), capped by
    max_blocks, and yielding >= 2 grid steps when possible (v7x megacore)."""
    if n_blocks <= 1:
        return 1
    cap = max(1, min(max_blocks, n_blocks // 2))
    for b in range(cap, 0, -1):
        if n_blocks % b == 0:
            return b
    return 1


def _ad_embedding_kernel(x_ref, w1_ref, wlin_ref, w2_ref, o_ref, *,
                         g, bins, chunk, n_chunks):
    # x_ref:    (g, TMG)          packed input scalars, lane-dense
    #                             (column mm, slot g <-> original row G*mm+g)
    # w1_ref:   (bins, 1)         Linear(1, bins).weight        (PyTorch (out,in))
    # wlin_ref: (g*bins, g*bins)  block-diag of t * (Wlin + 0.1*I)
    # w2_ref:   (g*bins, g*emb)   block-diag of Linear(bins, emb).weight.T (bf16)
    # o_ref:    (TMG, g*emb)      g*emb == 128 when emb divides 128 -> unmasked vst
    w1 = w1_ref[...]            # (bins, 1)
    wlin = wlin_ref[...]        # (g*bins, g*bins) f32
    w2 = w2_ref[...]            # (g*bins, g*emb)  bf16

    def body(c, carry):
        start = c * chunk
        if not isinstance(start, int):
            start = pl.multiple_of(start, chunk)
        xg = x_ref[:, pl.ds(start, chunk)]                   # (g, chunk)

        # layer1: Linear(1, bins) is an outer product -> VPU broadcast multiply
        # (K=1 MXU matmul avoided).  LeakyReLU(0.01) via a single max.
        y = w1[None, :, :] * xg[:, None, :]                  # (g, bins, chunk)
        y = jnp.maximum(y, 0.01 * y)

        # lin(y) + 0.1*y, scaled by t -- all folded into wlin_ref (block-diag).
        z = jnp.dot(wlin, y.reshape(g * bins, chunk),
                    preferred_element_type=jnp.float32)      # (g*bins, chunk)

        # Softmax over bins within each packed group, numerically stabilized.
        z = z.reshape(g, bins, chunk)
        z = z - jnp.max(z, axis=1, keepdims=True)
        e = jnp.exp(z)                                       # f32 (v5e-safe)
        p = e * pl.reciprocal(jnp.sum(e, axis=1, keepdims=True), approx=True)

        # layer2 against the block-diagonal W2^T -> lane-dense (chunk, g*emb).
        p = p.reshape(g * bins, chunk).astype(w2.dtype)      # bf16 MXU operands
        out = lax.dot_general(
            p, w2,
            dimension_numbers=(((0,), (0,)), ((), ())),
            preferred_element_type=jnp.float32)              # (chunk, g*emb)
        o_ref[pl.ds(start, chunk), :] = out.astype(o_ref.dtype)
        return carry

    if n_chunks == 1:
        body(0, 0)
    else:
        lax.fori_loop(0, n_chunks, body, 0)


def ad_embedding_forward(x, w1, wlin, w2, *, t=0.5, row_tile=32768,
                         chunk_lanes=256, out_dtype=jnp.bfloat16):
    """x: (B, 1, F).  w1: (bins, 1), wlin: (bins, bins), w2: (emb, bins) in
    PyTorch (out, in) layouts.  Returns (B, F * emb) in `out_dtype`
    (default bfloat16 — the kernel is output-writeback bound)."""
    B, one, F = x.shape
    assert one == 1, "AD_Layer's Linear(1, bins) requires the middle dim == 1"
    bins = w1.shape[0]
    emb = w2.shape[0]
    M = B * F

    # Lane-packing factor: pack G original rows side-by-side so the output row
    # is G*emb == 128 lanes wide (unmasked full-lane stores, lane-dense VMEM).
    if emb < 128 and 128 % emb == 0:
        G = 128 // emb
    else:
        G = 1  # TODO(synk): generalize packing when emb does not divide 128.

    align = 128 * G                       # original rows per 128-lane group
    M_pad = _round_up(M, align)
    n_blocks = M_pad // align
    tm_blocks = _pick_tm_blocks(n_blocks, max(1, row_tile // align))
    num_tiles = n_blocks // tm_blocks     # tm_blocks divides n_blocks
    TM = tm_blocks * align                # original rows per grid step
    TMG = TM // G                         # packed (lane) columns per grid step

    # Inner chunk along the lane axis; keeps per-chunk intermediates at ~8-16
    # vregs so nothing spills while the DMA tile stays large.
    chunk = min(chunk_lanes, TMG)
    while TMG % chunk != 0:
        chunk //= 2
    n_chunks = TMG // chunk

    # ---- host-side data prep (input traffic is tiny: 4 B/row) ----
    x_flat = x.reshape(M).astype(jnp.float32)        # row-major: (b, f) -> b*F+f
    if M_pad != M:
        x_flat = jnp.pad(x_flat, (0, M_pad - M))     # zero pad; finite outputs
    # Pack: tile i, lane-column mm, slot g  <->  original row i*TM + G*mm + g.
    x_tiles = x_flat.reshape(num_tiles, TMG, G).transpose(0, 2, 1)  # (nt, G, TMG)

    eye_b = jnp.eye(bins, dtype=jnp.float32)
    wlin_fused = (wlin.astype(jnp.float32) + 0.1 * eye_b) * float(t)
    eye_g = jnp.eye(G, dtype=jnp.float32)
    wlin_block = jnp.kron(eye_g, wlin_fused)                          # (G*bins, G*bins)
    w2_block = jnp.kron(eye_g, w2.T.astype(jnp.float32)).astype(jnp.bfloat16)  # (G*bins, G*emb)
    w1_ = w1.astype(jnp.float32)                                      # (bins, 1)

    out = pl.pallas_call(
        functools.partial(_ad_embedding_kernel,
                          g=G, bins=bins, chunk=chunk, n_chunks=n_chunks),
        out_shape=jax.ShapeDtypeStruct((M_pad // G, G * emb), out_dtype),
        grid=(num_tiles,),
        in_specs=[
            pl.BlockSpec((pl.Squeezed(), G, TMG), lambda i: (i, 0, 0)),  # x tile
            pl.BlockSpec((bins, 1), lambda i: (0, 0)),                   # w1 (resident)
            pl.BlockSpec((G * bins, G * bins), lambda i: (0, 0)),        # wlin blk-diag
            pl.BlockSpec((G * bins, G * emb), lambda i: (0, 0)),         # w2^T blk-diag
        ],
        out_specs=pl.BlockSpec((TMG, G * emb), lambda i: (i, 0)),
        compiler_params=pltpu.CompilerParams(
            dimension_semantics=("parallel",),
            vmem_limit_bytes=32 * 1024 * 1024),
    )(x_tiles, w1_, wlin_block, w2_block)

    if M_pad != M:
        # TODO(synk): ragged edge forces one post-kernel copy of the output;
        # choose B*F as a multiple of 128*G (or consume the padded buffer
        # downstream) to avoid it.
        out = out.reshape(M_pad * emb)[: M * emb]
    # Packed (M//G, G*emb) row-major == (M, emb) row-major == torch.cat order.
    return out.reshape(B, F * emb)


def _reference(x, w1, wlin, w2, *, t=0.5):
    # Pure-JAX reference matching the PyTorch module semantics (f32).
    B, _, F = x.shape
    outs = []
    for i in range(F):
        xi = x[:, :, i]                            # (B, 1)
        y = xi @ w1.T                              # (B, bins)
        y = jnp.where(y >= 0.0, y, 0.01 * y)
        y = y @ wlin.T + 0.1 * y
        y = y * t
        y = jax.nn.softmax(y, axis=-1)
        outs.append(y @ w2.T)                      # (B, emb)
    return jnp.concatenate(outs, axis=-1)


if __name__ == "__main__":
    # Small shapes consistent with the module: F scalar features, each mapped
    # to a `bins`-wide histogram then an `emb_size` embedding.
    B, num_feature, bins, emb_size, t = 2, 4, 8, 32, 0.5

    key = jax.random.PRNGKey(0)
    kx, k1, k2, k3 = jax.random.split(key, 4)

    x = jax.random.normal(kx, (B, 1, num_feature), dtype=jnp.float32)
    # PyTorch Linear weight layouts: (out_features, in_features).
    w1 = 0.5 * jax.random.normal(k1, (bins, 1), dtype=jnp.float32)
    wlin = 0.3 * jax.random.normal(k2, (bins, bins), dtype=jnp.float32)
    w2 = 0.2 * jax.random.normal(k3, (emb_size, bins), dtype=jnp.float32)

    out = ad_embedding_forward(x, w1, wlin, w2, t=t)
    out = jax.block_until_ready(out)

    ref = _reference(x, w1, wlin, w2, t=t)
    assert out.shape == (B, num_feature * emb_size), out.shape
    # Tolerance covers the bf16 output / bf16 MXU operands and the EUP
    # approximate reciprocal in the softmax denominator.
    assert jnp.allclose(out.astype(jnp.float32), ref, atol=2e-2, rtol=2e-2), \
        "mismatch vs reference"

    print("KERNEL_OK")
</pallas_src>

<mosaic_0001>
module attributes {stable_mosaic.version = 11 : i64} {
  func.func @_ad_embedding_kernel(%arg0: i32, %arg1: memref<1x4x128xf32, #tpu.memory_space<vmem>>, %arg2: memref<8x1xf32, #tpu.memory_space<vmem>>, %arg3: memref<32x32xf32, #tpu.memory_space<vmem>>, %arg4: memref<32x128xbf16, #tpu.memory_space<vmem>>, %arg5: memref<128x128xbf16, #tpu.memory_space<vmem>>) attributes {dimension_semantics = [#tpu.dimension_semantics<parallel>], iteration_bounds = array<i64: 1>, scalar_prefetch = 0 : i64, scratch_operands = 0 : i64, tpu.core_type = #tpu.core_type<tc>, window_params = [{transform_indices = @transform_0, window_bounds = array<i64: 1, 4, 128>}, {pipeline_mode = #tpu.pipeline_mode<synchronous>, transform_indices = @transform_1, window_bounds = array<i64: 8, 1>}, {pipeline_mode = #tpu.pipeline_mode<synchronous>, transform_indices = @transform_2, window_bounds = array<i64: 32, 32>}, {pipeline_mode = #tpu.pipeline_mode<synchronous>, transform_indices = @transform_3, window_bounds = array<i64: 32, 128>}, {transform_indices = @transform_4, window_bounds = array<i64: 128, 128>}]} {
    %c0 = arith.constant 0 : index
    %c0_0 = arith.constant 0 : index
    %0 = vector.load %arg2[%c0, %c0_0] : memref<8x1xf32, #tpu.memory_space<vmem>>, vector<8x1xf32>
    %c0_1 = arith.constant 0 : index
    %c0_2 = arith.constant 0 : index
    %1 = vector.load %arg3[%c0_1, %c0_2] : memref<32x32xf32, #tpu.memory_space<vmem>>, vector<32x32xf32>
    %c0_3 = arith.constant 0 : index
    %c0_4 = arith.constant 0 : index
    %2 = vector.load %arg4[%c0_3, %c0_4] : memref<32x128xbf16, #tpu.memory_space<vmem>>, vector<32x128xbf16>
    %c0_5 = arith.constant 0 : index
    %c0_6 = arith.constant 0 : index
    %c0_7 = arith.constant 0 : index
    %3 = vector.load %arg1[%c0_5, %c0_6, %c0_7] : memref<1x4x128xf32, #tpu.memory_space<vmem>>, vector<1x4x128xf32>
    %4 = vector.shape_cast %3 : vector<1x4x128xf32> to vector<4x128xf32>
    %5 = vector.shape_cast %0 : vector<8x1xf32> to vector<1x8x1xf32>
    %6 = vector.shape_cast %4 : vector<4x128xf32> to vector<4x1x128xf32>
    %7 = vector.broadcast %5 : vector<1x8x1xf32> to vector<4x8x128xf32>
    %8 = vector.broadcast %6 : vector<4x1x128xf32> to vector<4x8x128xf32>
    %9 = arith.mulf %7, %8 : vector<4x8x128xf32>
    %cst = arith.constant 0.00999999977 : f32
    %10 = vector.broadcast %cst : f32 to vector<4x8x128xf32>
    %11 = arith.mulf %10, %9 : vector<4x8x128xf32>
    %12 = arith.maximumf %9, %11 : vector<4x8x128xf32>
    %13 = vector.shape_cast %12 : vector<4x8x128xf32> to vector<32x128xf32>
    %cst_8 = arith.constant dense<0.000000e+00> : vector<32x128xf32>
    %14 = tpu.matmul %1, %13, %cst_8 {dimension_numbers = #tpu.dot_dimension_numbers<[1], [0], [0], [1], [0, 0, 1, 1], [], []>} : vector<32x32xf32>, vector<32x128xf32>, vector<32x128xf32> -> vector<32x128xf32>
    %15 = vector.shape_cast %14 : vector<32x128xf32> to vector<4x8x128xf32>
    %cst_9 = arith.constant dense<0xFF800000> : vector<4x128xf32>
    %16 = vector.multi_reduction <maximumf>, %15, %cst_9 [1] : vector<4x8x128xf32> to vector<4x128xf32>
    %17 = vector.shape_cast %16 : vector<4x128xf32> to vector<4x1x128xf32>
    %18 = vector.broadcast %17 : vector<4x1x128xf32> to vector<4x8x128xf32>
    %19 = arith.subf %15, %18 : vector<4x8x128xf32>
    %20 = math.exp %19 : vector<4x8x128xf32>
    %cst_10 = arith.constant dense<0.000000e+00> : vector<4x128xf32>
    %21 = vector.multi_reduction <add>, %20, %cst_10 [1] : vector<4x8x128xf32> to vector<4x128xf32>
    %22 = vector.shape_cast %21 : vector<4x128xf32> to vector<4x1x128xf32>
    %23 = tpu.reciprocal %22 {approx = true} : vector<4x1x128xf32> -> vector<4x1x128xf32>
    %24 = vector.broadcast %23 : vector<4x1x128xf32> to vector<4x8x128xf32>
    %25 = arith.mulf %20, %24 : vector<4x8x128xf32>
    %26 = vector.shape_cast %25 : vector<4x8x128xf32> to vector<32x128xf32>
    %27 = arith.truncf %26 : vector<32x128xf32> to vector<32x128xbf16>
    %cst_11 = arith.constant dense<0.000000e+00> : vector<128x128xf32>
    %28 = tpu.matmul %27, %2, %cst_11 {dimension_numbers = #tpu.dot_dimension_numbers<[0], [0], [1], [1], [0, 1, 1, 1], [], []>} : vector<32x128xbf16>, vector<32x128xbf16>, vector<128x128xf32> -> vector<128x128xf32>
    %29 = arith.truncf %28 : vector<128x128xf32> to vector<128x128xbf16>
    %c0_12 = arith.constant 0 : index
    %c0_13 = arith.constant 0 : index
    %30 = vector.load %arg5[%c0_12, %c0_13] : memref<128x128xbf16, #tpu.memory_space<vmem>>, vector<128x128xbf16>
    tpu.vector_store %arg5[%c0_12, %c0_13], %29 {strides = array<i32>} : memref<128x128xbf16, #tpu.memory_space<vmem>>, vector<128x128xbf16>,
    return
  }
  func.func @transform_0(%arg0: i32) -> (i32, i32, i32) {
    %c0_i32 = arith.constant 0 : i32
    %c0_i32_0 = arith.constant 0 : i32
    %c0_i32_1 = arith.constant 0 : i32
    return %arg0, %c0_i32, %c0_i32_0 : i32, i32, i32
  }
  func.func @transform_1(%arg0: i32) -> (i32, i32) {
    %c0_i32 = arith.constant 0 : i32
    %c0_i32_0 = arith.constant 0 : i32
    %c0_i32_1 = arith.constant 0 : i32
    return %c0_i32, %c0_i32_0 : i32, i32
  }
  func.func @transform_2(%arg0: i32) -> (i32, i32) {
    %c0_i32 = arith.constant 0 : i32
    %c0_i32_0 = arith.constant 0 : i32
    %c0_i32_1 = arith.constant 0 : i32
    return %c0_i32, %c0_i32_0 : i32, i32
  }
  func.func @transform_3(%arg0: i32) -> (i32, i32) {
    %c0_i32 = arith.constant 0 : i32
    %c0_i32_0 = arith.constant 0 : i32
    %c0_i32_1 = arith.constant 0 : i32
    return %c0_i32, %c0_i32_0 : i32, i32
  }
  func.func @transform_4(%arg0: i32) -> (i32, i32) {
    %c0_i32 = arith.constant 0 : i32
    %c0_i32_0 = arith.constant 0 : i32
    return %arg0, %c0_i32 : i32, i32
  }
}

</mosaic_0001>

<llo_original>
// kernel: tpu_custom_call.1
$region0: #{tpu_custom_call.1}
  #allocation0 [shape = 'u32[]', space=smem, size = 0x4, offset = 0x4, fixed_abs, tag = 'smem constant byte address 0x4 - core index']
  #allocation1 [shape = 'u32[144,128]{1,0:T(1,128)}', space=vmem, size = 0x12000, scoped, tag = 'internal scratch']
  %s0 = inlined_call_operand.vmem [shape: f32[1,4,128], index: 0, kind: input, shape index: {}]
  %s1 = inlined_call_operand.vmem [shape: f32[8,1], index: 1, kind: input, shape index: {}]
  %s2 = inlined_call_operand.hbm [shape: f32[32,32], index: 2, kind: input, shape index: {}]
  %s3 = inlined_call_operand.hbm [shape: bf16[32,128], index: 3, kind: input, shape index: {}]
  %s4 = inlined_call_operand.hbm [shape: bf16[128,128], index: 4, kind: output, shape index: {}]
  %s5 = sld [smem:[#allocation0]]
  $region34: #{tpu_custom_call.1} parent=0
    _
  %s7 = ssub.s32 1, %s5
  %s8 = scalar_select 0, %s7, %s5
  $region1: #{tpu_custom_call.1} parent=0
    #allocation2 [shape = 'u8[16384]{0}', space=vmem, size = 0x4000, scoped, tag = 'input window, operand 2, single buffered']
    #allocation3 [shape = 's32[1]{0}', space=sflag, size = 0x4, scoped, tag = 'scoped memory for tpu_custom_call.1']
    #allocation4 [shape = 's32[1]{0}', space=sflag, size = 0x4, scoped, tag = 'scoped memory for tpu_custom_call.1']
    #allocation5 [shape = 'u8[8192]{0}', space=vmem, size = 0x2000, scoped, tag = 'input window, operand 3, single buffered']
    #allocation6 [shape = 's32[1]{0}', space=sflag, size = 0x4, scoped, tag = 'scoped memory for tpu_custom_call.1']
    #allocation7 [shape = 'u8[32768]{0}', space=vmem, size = 0x8000, scoped, tag = 'output window, operand 0, single buffered']
    %9 = vsyncpa [#allocation3], 0
    %10 = vsyncpa [#allocation6], 0
    %11 = vsyncpa [#allocation4], 0
    // Predicated region
    $region2: #{tpu_custom_call.1} parent=1 // pred_check
      _
    $region3: #{tpu_custom_call.1} parent=1 // pred_check_branch
      %13 = sbr.rel (0) target = $region5
    $region4: #{tpu_custom_call.1} parent=1 // pred_region
      _
    $region5: #{tpu_custom_call.1} parent=1 // pred_fallthru
      _
    // Predicated region
    $region6: #{tpu_custom_call.1} parent=1 // pred_check
      _
    $region7: #{tpu_custom_call.1} parent=1 // pred_check_branch
      %15 = sbr.rel (0) target = $region9
    $region8: #{tpu_custom_call.1} parent=1 // pred_region
      _
    $region9: #{tpu_custom_call.1} parent=1 // pred_fallthru
      _
    // Predicated region
    $region10: #{tpu_custom_call.1} parent=1 // pred_check
      _
    $region11: #{tpu_custom_call.1} parent=1 // pred_check_branch
      %17 = sbr.rel (0) target = $region13
    $region12: #{tpu_custom_call.1} parent=1 // pred_region
      %s19 = ssub.s32 512, 512
      %20 = vsyncadd [#allocation3], %s19
      %s21 = sshll.u32 [#allocation2], 4
      %s22 = int_to_ptr.vmem [resolvable:$true] %s21
      %27 = dma.hbm_to_vmem [thread:$0]  %s2, 512, %s22, [#allocation3], 128, 128, 8
    $region13: #{tpu_custom_call.1} parent=1 // pred_fallthru
      _
    // Predicated region
    $region14: #{tpu_custom_call.1} parent=1 // pred_check
      _
    $region15: #{tpu_custom_call.1} parent=1 // pred_check_branch
      %29 = sbr.rel (0) target = $region17
    $region16: #{tpu_custom_call.1} parent=1 // pred_region
      %s31 = ssub.s32 256, 256
      %32 = vsyncadd [#allocation6], %s31
      %s33 = sshll.u32 [#allocation5], 4
      %s34 = int_to_ptr.vmem [resolvable:$true] %s33
      %39 = dma.hbm_to_vmem [thread:$0]  %s3, 256, %s34, [#allocation6], 64, 64, 4
    $region17: #{tpu_custom_call.1} parent=1 // pred_fallthru
      _
    // Predicated region
    $region18: #{tpu_custom_call.1} parent=1 // pred_check
      _
    $region19: #{tpu_custom_call.1} parent=1 // pred_check_branch
      %41 = sbr.rel (0) target = $region21
    $region20: #{tpu_custom_call.1} parent=1 // pred_region
      %42 = dma.done [#allocation3], 512
    $region21: #{tpu_custom_call.1} parent=1 // pred_fallthru
      _
    // Predicated region
    $region22: #{tpu_custom_call.1} parent=1 // pred_check
      _
    $region23: #{tpu_custom_call.1} parent=1 // pred_check_branch
      %44 = sbr.rel (0) target = $region25
    $region24: #{tpu_custom_call.1} parent=1 // pred_region
      %45 = dma.done [#allocation6], 256
    $region25: #{tpu_custom_call.1} parent=1 // pred_fallthru
      _
    %v47 = vld [vmem:[%s1] sm:$0xff]
    %v48 = vld [vmem:[#allocation2] sm:$0xff]
    %v49 = vld [vmem:[#allocation2 + $0x8] sm:$0xff]
    %v50 = vld [vmem:[#allocation2 + $0x10] sm:$0xff]
    %v51 = vld [vmem:[#allocation2 + $0x18] sm:$0xff]
    %v52 = vld [vmem:[#allocation5] sm:$0xf]
    %v53 = vld [vmem:[#allocation5 + $0x4] sm:$0xf]
    %v54 = vld [vmem:[#allocation5 + $0x8] sm:$0xf]
    %v55 = vld [vmem:[#allocation5 + $0xc] sm:$0xf]
    %v56 = vld [vmem:[%s0] sm:$0xf]
    %v59 = vunpack.c.l.s4 1966171168
    %v60 = vunpack.c.0.s8 %v59
    %v61 = vlaneseq
    %v62 = vshrl.u32 %v61, 7
    %v63 = vsub.s32 %v60, %v62
    %v64 = vrot.slane %v56, %v63
    %v65 = vcombine.high %v64, %v64
    %v67 = vunpack.c.l.s4 1966171168
    %v68 = vunpack.c.0.s8 %v67
    %v69 = vlaneseq
    %v70 = vshrl.u32 %v69, 7
    %v71 = vsub.s32 %v68, %v70
    %v72 = vrot.slane %v64, %v71
    %v74 = vunpack.c.l.s4 1966171168
    %v75 = vunpack.c.0.s8 %v74
    %v76 = vlaneseq
    %v77 = vshrl.u32 %v76, 7
    %v78 = vsub.s32 %v75, %v77
    %v79 = vrot.slane %v65, %v78
    %v80 = vcombine.high %v72, %v72
    %v81 = vcombine.high %v79, %v79
    %83 = vset.pattern.permute.xlu0 0
    %84 = vperm.xlu0 %83, %v47
    %v85 = vpop.permute.xlu0 %84
    %v87 = vlaneseq
    %v88 = vshrl.u32 %v87, 7
    %v89 = vsub.s32 0, %v88
    %v90 = vrot.slane %v72, %v89
    %v91 = vlaneseq
    %v92 = vshrl.u32 %v91, 7
    %v93 = vsub.s32 0, %v92
    %v94 = vrot.slane %v79, %v93
    %v95 = vlaneseq
    %v96 = vshrl.u32 %v95, 7
    %v97 = vsub.s32 0, %v96
    %v98 = vrot.slane %v80, %v97
    %v99 = vlaneseq
    %v100 = vshrl.u32 %v99, 7
    %v101 = vsub.s32 0, %v100
    %v102 = vrot.slane %v81, %v101
    %v107 = vmul.f32 %v85, %v90
    %v108 = vmul.f32 %v85, %v94
    %v109 = vmul.f32 %v85, %v98
    %v110 = vmul.f32 %v85, %v102
    %v111 = vmul.f32 %v107, 0.01
    %v112 = vmul.f32 %v108, 0.01
    %v113 = vmul.f32 %v109, 0.01
    %v114 = vmul.f32 %v110, 0.01
    %v115 = vmax.f32 %v107, %v111
    %v116 = vmax.f32 %v108, %v112
    %v117 = vmax.f32 %v109, %v113
    %v118 = vmax.f32 %v110, %v114
    %vm119 = vcmask 261120
    %v121 = vsel %vm119, %v48, 0
    %v124 = vsel %vm119, %v49, 0
    %v127 = vsel %vm119, %v50, 0
    %v130 = vsel %vm119, %v51, 0
    %132 = vmatprep.subr.mxu0 0.0
    %133 = vmatpush1.msra.mxu0 0.0
    %134 = vmatprep.subr.mxu0 0.0
    %135 = vmatpush1.msra.mxu0 0.0
    %136 = vmatprep.subr.mxu0 0.0
    %137 = vmatpush1.msra.mxu0 0.0
    %138 = vmatprep.subr.mxu0 0.0
    %139 = vmatpush1.msra.mxu0 0.0
    %140 = vmatprep.subr.mxu0 0.0
    %141 = vmatpush1.msra.mxu0 0.0
    %142 = vmatprep.subr.mxu0 0.0
    %143 = vmatpush1.msra.mxu0 0.0
    %144 = vmatprep.subr.mxu0 0.0
    %145 = vmatpush1.msra.mxu0 0.0
    %146 = vmatprep.subr.mxu0 0.0
    %147 = vmatpush1.msra.mxu0 0.0
    %148 = vmatprep.subr.mxu0 0.0
    %149 = vmatpush1.msra.mxu0 0.0
    %150 = vmatprep.subr.mxu0 0.0
    %151 = vmatpush1.msra.mxu0 0.0
    %152 = vmatprep.subr.mxu0 0.0
    %153 = vmatpush1.msra.mxu0 0.0
    %154 = vmatprep.subr.mxu0 0.0
    %155 = vmatpush1.msra.mxu0 0.0
    %156 = vmatprep.subr.mxu0 0.0
    %157 = vmatpush1.msra.mxu0 %v118
    %158 = vmatprep.subr.mxu0 0.0
    %159 = vmatpush1.msra.mxu0 %v117
    %160 = vmatprep.subr.mxu0 0.0
    %161 = vmatpush1.msra.mxu0 %v116
    %162 = vmatprep.subr.mxu0 0.0
    %163 = vmatpush1.msra.mxu0 %v115
    %164 = vmatprep.subr.mxu0 0.0
    %165 = vmatpush2.msra.mxu0 0.0
    %166 = vmatprep.subr.mxu0 0.0
    %167 = vmatpush2.msra.mxu0 0.0
    %168 = vmatprep.subr.mxu0 0.0
    %169 = vmatpush2.msra.mxu0 0.0
    %170 = vmatprep.subr.mxu0 0.0
    %171 = vmatpush2.msra.mxu0 0.0
    %172 = vmatprep.subr.mxu0 0.0
    %173 = vmatpush2.msra.mxu0 0.0
    %174 = vmatprep.subr.mxu0 0.0
    %175 = vmatpush2.msra.mxu0 0.0
    %176 = vmatprep.subr.mxu0 0.0
    %177 = vmatpush2.msra.mxu0 0.0
    %178 = vmatprep.subr.mxu0 0.0
    %179 = vmatpush2.msra.mxu0 0.0
    %180 = vmatprep.subr.mxu0 0.0
    %181 = vmatpush2.msra.mxu0 0.0
    %182 = vmatprep.subr.mxu0 0.0
    %183 = vmatpush2.msra.mxu0 0.0
    %184 = vmatprep.subr.mxu0 0.0
    %185 = vmatpush2.msra.mxu0 0.0
    %186 = vmatprep.subr.mxu0 0.0
    %187 = vmatpush2.msra.mxu0 0.0
    %188 = vmatprep.subr.mxu0 0.0
    %189 = vmatpush2.msra.mxu0 0.0
    %190 = vmatprep.subr.mxu0 0.0
    %191 = vmatpush2.msra.mxu0 0.0
    %192 = vmatprep.subr.mxu0 0.0
    %193 = vmatpush2.msra.mxu0 0.0
    %194 = vmatprep.subr.mxu0 0.0
    %195 = vmatpush2.msra.mxu0 0.0
    %196 = vmatprep.mubr.f32.mxu0 0.0
    %197 = vmatmul.mubr.f32.gmra.mxu0 %v121
    %v198 = vpop.f32.mrf.mxu0
    %v199 = vadd.f32 0.0, %v198
    %v200 = vpop.f32.mrf.mxu0
    %201 = vmatprep.mubr.f32.mxu0 0.0
    %202 = vmatmul.mubr.f32.gmra.mxu0 %v124
    %v203 = vpop.f32.mrf.mxu0
    %v204 = vadd.f32 0.0, %v203
    %v205 = vpop.f32.mrf.mxu0
    %206 = vmatprep.mubr.f32.mxu0 0.0
    %207 = vmatmul.mubr.f32.gmra.mxu0 %v127
    %v208 = vpop.f32.mrf.mxu0
    %v209 = vadd.f32 0.0, %v208
    %v210 = vpop.f32.mrf.mxu0
    %211 = vmatprep.mubr.f32.mxu0 0.0
    %212 = vmatmul.mubr.f32.gmra.mxu0 %v130
    %v213 = vpop.f32.mrf.mxu0
    %v214 = vadd.f32 0.0, %v213
    %v215 = vpop.f32.mrf.mxu0
    %216 = vdwg.mxu0
    %v217 = vrot.slane %v199, 4
    %v218 = vmax.f32 %v199, %v217
    %v219 = vrot.slane %v218, 2
    %v220 = vmax.f32 %v218, %v219
    %v221 = vrot.slane %v220, 1
    %v222 = vmax.f32 %v220, %v221
    %v223 = vrot.slane %v204, 4
    %v224 = vmax.f32 %v204, %v223
    %v225 = vrot.slane %v224, 2
    %v226 = vmax.f32 %v224, %v225
    %v227 = vrot.slane %v226, 1
    %v228 = vmax.f32 %v226, %v227
    %v229 = vrot.slane %v209, 4
    %v230 = vmax.f32 %v209, %v229
    %v231 = vrot.slane %v230, 2
    %v232 = vmax.f32 %v230, %v231
    %v233 = vrot.slane %v232, 1
    %v234 = vmax.f32 %v232, %v233
    %v235 = vrot.slane %v214, 4
    %v236 = vmax.f32 %v214, %v235
    %v237 = vrot.slane %v236, 2
    %v238 = vmax.f32 %v236, %v237
    %v239 = vrot.slane %v238, 1
    %v240 = vmax.f32 %v238, %v239
    %v241 = vsub.f32 %v199, %v222
    %v242 = vsub.f32 %v204, %v228
    %v243 = vsub.f32 %v209, %v234
    %v244 = vsub.f32 %v214, %v240
    %v245 = vmul.f32 %v241, 1.442695
    %v246 = vpow.pop %v245
    %v247 = vmul.f32 %v242, 1.442695
    %v248 = vpow.pop %v247
    %v249 = vmul.f32 %v243, 1.442695
    %v250 = vpow.pop %v249
    %v251 = vmul.f32 %v244, 1.442695
    %v252 = vpow.pop %v251
    %v253 = vrot.slane %v246, 4
    %v254 = vadd.f32 %v246, %v253
    %v255 = vrot.slane %v254, 2
    %v256 = vadd.f32 %v254, %v255
    %v257 = vrot.slane %v256, 1
    %v258 = vadd.f32 %v256, %v257
    %v259 = vrot.slane %v248, 4
    %v260 = vadd.f32 %v248, %v259
    %v261 = vrot.slane %v260, 2
    %v262 = vadd.f32 %v260, %v261
    %v263 = vrot.slane %v262, 1
    %v264 = vadd.f32 %v262, %v263
    %v265 = vrot.slane %v250, 4
    %v266 = vadd.f32 %v250, %v265
    %v267 = vrot.slane %v266, 2
    %v268 = vadd.f32 %v266, %v267
    %v269 = vrot.slane %v268, 1
    %v270 = vadd.f32 %v268, %v269
    %v271 = vrot.slane %v252, 4
    %v272 = vadd.f32 %v252, %v271
    %v273 = vrot.slane %v272, 2
    %v274 = vadd.f32 %v272, %v273
    %v275 = vrot.slane %v274, 1
    %v276 = vadd.f32 %v274, %v275
    %v277 = vrcp.pop %v258
    %v278 = vrcp.pop %v264
    %v279 = vrcp.pop %v270
    %v280 = vrcp.pop %v276
    %v281 = vmul.f32 %v246, %v277
    %v282 = vmul.f32 %v248, %v278
    %v283 = vmul.f32 %v250, %v279
    %v284 = vmul.f32 %v252, %v280
    %v285 = vpack.c.bf16 %v282, %v281
    %v286 = vpack.c.bf16 %v284, %v283
    %287 = vxpose.xlu0.c.b16.start [1/8] %v285, 128
    %288 = vxpose.xlu0.c.b16.cont [2/8] %v286, 128
    %289 = vxpose.xlu0.c.b16.cont [3/8] 0, 128
    %290 = vxpose.xlu0.c.b16.cont [4/8] 0, 128
    %291 = vxpose.xlu0.c.b16.cont [5/8] 0, 128
    %292 = vxpose.xlu0.c.b16.cont [6/8] 0, 128
    %293 = vxpose.xlu0.c.b16.cont [7/8] 0, 128
    %294 = vxpose.xlu0.c.b16.end [8/8] 0, 128
    %v295 = vpop.trf.xlu0
    %v296 = vpop.trf.xlu0
    %v297 = vpop.trf.xlu0
    %v298 = vpop.trf.xlu0
    %v299 = vpop.trf.xlu0
    %v300 = vpop.trf.xlu0
    %v301 = vpop.trf.xlu0
    %v302 = vpop.trf.xlu0
    %v307 = vunpack.c.l.b16 %v52
    %v308 = vunpack.c.l.b16 %v53
    %v309 = vunpack.c.l.b16 %v54
    %v310 = vunpack.c.l.b16 %v55
    %v311 = vpack.c.b16 %v308, %v307
    %v312 = vpack.c.b16 %v310, %v309
    %v316 = vsel %vm119, %v295, 0
    %v319 = vsel %vm119, %v296, 0
    %v322 = vsel %vm119, %v297, 0
    %v325 = vsel %vm119, %v298, 0
    %v328 = vsel %vm119, %v299, 0
    %v331 = vsel %vm119, %v300, 0
    %v334 = vsel %vm119, %v301, 0
    %v337 = vsel %vm119, %v302, 0
    %339 = vmatprep.subr.bf16.mxu0 0
    %340 = vmatpush1.bf16.msra.mxu0 0
    %341 = vmatprep.subr.bf16.mxu0 0
    %342 = vmatpush1.bf16.msra.mxu0 0
    %343 = vmatprep.subr.bf16.mxu0 0
    %344 = vmatpush1.bf16.msra.mxu0 0
    %345 = vmatprep.subr.bf16.mxu0 0
    %346 = vmatpush1.bf16.msra.mxu0 0
    %347 = vmatprep.subr.bf16.mxu0 0
    %348 = vmatpush1.bf16.msra.mxu0 0
    %349 = vmatprep.subr.bf16.mxu0 0
    %350 = vmatpush1.bf16.msra.mxu0 0
    %351 = vmatprep.subr.bf16.mxu0 0
    %352 = vmatpush1.bf16.msra.mxu0 %v312
    %353 = vmatprep.subr.bf16.mxu0 0
    %354 = vmatpush1.bf16.msra.mxu0 %v311
    %355 = vmatprep.subr.bf16.mxu0 0
    %356 = vmatpush2.bf16.msra.mxu0 0
    %357 = vmatprep.subr.bf16.mxu0 0
    %358 = vmatpush2.bf16.msra.mxu0 0
    %359 = vmatprep.subr.bf16.mxu0 0
    %360 = vmatpush2.bf16.msra.mxu0 0
    %361 = vmatprep.subr.bf16.mxu0 0
    %362 = vmatpush2.bf16.msra.mxu0 0
    %363 = vmatprep.subr.bf16.mxu0 0
    %364 = vmatpush2.bf16.msra.mxu0 0
    %365 = vmatprep.subr.bf16.mxu0 0
    %366 = vmatpush2.bf16.msra.mxu0 0
    %367 = vmatprep.subr.bf16.mxu0 0
    %368 = vmatpush2.bf16.msra.mxu0 0
    %369 = vmatprep.subr.bf16.mxu0 0
    %370 = vmatpush2.bf16.msra.mxu0 0
    %371 = vmatprep.mubr.bf16.mxu0 0
    %372 = vmatmul.mubr.bf16.gmra.mxu0 %v316
    %v373 = vpop.f32.mrf.mxu0
    %v374 = vadd.f32 0.0, %v373
    %v375 = vpop.f32.mrf.mxu0
    %v376 = vpop.f32.mrf.mxu0
    %v377 = vadd.f32 0.0, %v376
    %v378 = vpop.f32.mrf.mxu0
    %379 = vmatprep.mubr.bf16.mxu0 0
    %380 = vmatmul.mubr.bf16.gmra.mxu0 %v319
    %v381 = vpop.f32.mrf.mxu0
    %v382 = vadd.f32 0.0, %v381
    %v383 = vpop.f32.mrf.mxu0
    %v384 = vpop.f32.mrf.mxu0
    %v385 = vadd.f32 0.0, %v384
    %v386 = vpop.f32.mrf.mxu0
    %387 = vmatprep.mubr.bf16.mxu0 0
    %388 = vmatmul.mubr.bf16.gmra.mxu0 %v322
    %v389 = vpop.f32.mrf.mxu0
    %v390 = vadd.f32 0.0, %v389
    %v391 = vpop.f32.mrf.mxu0
    %v392 = vpop.f32.mrf.mxu0
    %v393 = vadd.f32 0.0, %v392
    %v394 = vpop.f32.mrf.mxu0
    %395 = vmatprep.mubr.bf16.mxu0 0
    %396 = vmatmul.mubr.bf16.gmra.mxu0 %v325
    %v397 = vpop.f32.mrf.mxu0
    %v398 = vadd.f32 0.0, %v397
    %v399 = vpop.f32.mrf.mxu0
    %v400 = vpop.f32.mrf.mxu0
    %v401 = vadd.f32 0.0, %v400
    %v402 = vpop.f32.mrf.mxu0
    %403 = vmatprep.mubr.bf16.mxu0 0
    %404 = vmatmul.mubr.bf16.gmra.mxu0 %v328
    %v405 = vpop.f32.mrf.mxu0
    %v406 = vadd.f32 0.0, %v405
    %v407 = vpop.f32.mrf.mxu0
    %v408 = vpop.f32.mrf.mxu0
    %v409 = vadd.f32 0.0, %v408
    %v410 = vpop.f32.mrf.mxu0
    %411 = vmatprep.mubr.bf16.mxu0 0
    %412 = vmatmul.mubr.bf16.gmra.mxu0 %v331
    %v413 = vpop.f32.mrf.mxu0
    %v414 = vadd.f32 0.0, %v413
    %v415 = vpop.f32.mrf.mxu0
    %v416 = vpop.f32.mrf.mxu0
    %v417 = vadd.f32 0.0, %v416
    %v418 = vpop.f32.mrf.mxu0
    %419 = vmatprep.mubr.bf16.mxu0 0
    %420 = vmatmul.mubr.bf16.gmra.mxu0 %v334
    %v421 = vpop.f32.mrf.mxu0
    %v422 = vadd.f32 0.0, %v421
    %v423 = vpop.f32.mrf.mxu0
    %v424 = vpop.f32.mrf.mxu0
    %v425 = vadd.f32 0.0, %v424
    %v426 = vpop.f32.mrf.mxu0
    %427 = vmatprep.mubr.bf16.mxu0 0
    %428 = vmatmul.mubr.bf16.gmra.mxu0 %v337
    %v429 = vpop.f32.mrf.mxu0
    %v430 = vadd.f32 0.0, %v429
    %v431 = vpop.f32.mrf.mxu0
    %v432 = vpop.f32.mrf.mxu0
    %v433 = vadd.f32 0.0, %v432
    %v434 = vpop.f32.mrf.mxu0
    %435 = vdwg.mxu0
    %v436 = vpack.c.bf16 %v377, %v374
    %v437 = vpack.c.bf16 %v385, %v382
    %v438 = vpack.c.bf16 %v393, %v390
    %v439 = vpack.c.bf16 %v401, %v398
    %v440 = vpack.c.bf16 %v409, %v406
    %v441 = vpack.c.bf16 %v417, %v414
    %v442 = vpack.c.bf16 %v425, %v422
    %v443 = vpack.c.bf16 %v433, %v430
    %v452 = vunpack.c.l.b16 %v436
    %v453 = vunpack.c.h.b16 %v436
    %v454 = vunpack.c.l.b16 %v437
    %v455 = vunpack.c.h.b16 %v437
    %v456 = vunpack.c.l.b16 %v438
    %v457 = vunpack.c.h.b16 %v438
    %v458 = vunpack.c.l.b16 %v439
    %v459 = vunpack.c.h.b16 %v439
    %v460 = vunpack.c.l.b16 %v440
    %v461 = vunpack.c.h.b16 %v440
    %v462 = vunpack.c.l.b16 %v441
    %v463 = vunpack.c.h.b16 %v441
    %v464 = vunpack.c.l.b16 %v442
    %v465 = vunpack.c.h.b16 %v442
    %v466 = vunpack.c.l.b16 %v443
    %v467 = vunpack.c.h.b16 %v443
    %v468 = vpack.c.b16 %v452, %v452
    %v469 = vpack.c.b16 %v453, %v453
    %v470 = vpack.c.b16 %v454, %v454
    %v471 = vpack.c.b16 %v455, %v455
    %v472 = vpack.c.b16 %v456, %v456
    %v473 = vpack.c.b16 %v457, %v457
    %v474 = vpack.c.b16 %v458, %v458
    %v475 = vpack.c.b16 %v459, %v459
    %v476 = vpack.c.b16 %v460, %v460
    %v477 = vpack.c.b16 %v461, %v461
    %v478 = vpack.c.b16 %v462, %v462
    %v479 = vpack.c.b16 %v463, %v463
    %v480 = vpack.c.b16 %v464, %v464
    %v481 = vpack.c.b16 %v465, %v465
    %v482 = vpack.c.b16 %v466, %v466
    %v483 = vpack.c.b16 %v467, %v467
    %500 = vst [vmem:[#allocation7] sm:$0xf] %v468
    %501 = vst [vmem:[#allocation7 + $0x4] sm:$0xf] %v469
    %502 = vst [vmem:[#allocation7 + $0x8] sm:$0xf] %v470
    %503 = vst [vmem:[#allocation7 + $0xc] sm:$0xf] %v471
    %504 = vst [vmem:[#allocation7 + $0x10] sm:$0xf] %v472
    %505 = vst [vmem:[#allocation7 + $0x14] sm:$0xf] %v473
    %506 = vst [vmem:[#allocation7 + $0x18] sm:$0xf] %v474
    %507 = vst [vmem:[#allocation7 + $0x1c] sm:$0xf] %v475
    %508 = vst [vmem:[#allocation7 + $0x20] sm:$0xf] %v476
    %509 = vst [vmem:[#allocation7 + $0x24] sm:$0xf] %v477
    %510 = vst [vmem:[#allocation7 + $0x28] sm:$0xf] %v478
    %511 = vst [vmem:[#allocation7 + $0x2c] sm:$0xf] %v479
    %512 = vst [vmem:[#allocation7 + $0x30] sm:$0xf] %v480
    %513 = vst [vmem:[#allocation7 + $0x34] sm:$0xf] %v481
    %514 = vst [vmem:[#allocation7 + $0x38] sm:$0xf] %v482
    %515 = vst [vmem:[#allocation7 + $0x3c] sm:$0xf] %v483
    // Predicated region
    $region26: #{tpu_custom_call.1} parent=1 // pred_check
      _
    $region27: #{tpu_custom_call.1} parent=1 // pred_check_branch
      %517 = sbr.rel (0) target = $region29
    $region28: #{tpu_custom_call.1} parent=1 // pred_region
      %s519 = ssub.s32 1024, 1024
      %520 = vsyncadd [#allocation4], %s519
      %s521 = sshll.u32 [#allocation7], 4
      %s522 = int_to_ptr.vmem [resolvable:$true] %s521
      %527 = dma.vmem_to_hbm [thread:$0]  %s522, 1024, %s4, [#allocation4], 64, 64, 4
    $region29: #{tpu_custom_call.1} parent=1 // pred_fallthru
      _
    // Predicated region
    $region30: #{tpu_custom_call.1} parent=1 // pred_check
      _
    $region31: #{tpu_custom_call.1} parent=1 // pred_check_branch
      %529 = sbr.rel (0) target = $region33
    $region32: #{tpu_custom_call.1} parent=1 // pred_region
      %530 = dma.done [#allocation4], 1024
    $region33: #{tpu_custom_call.1} parent=1 // pred_fallthru
      _
    %531 = vsyncpa [#allocation3], 1
    %532 = vsyncpa [#allocation6], 1
    %533 = vsyncpa [#allocation4], 1

</llo_original>
